<compile_context>
chip_gen: v7x
topology: tpu7x:2x2x1
jax: 0.10.0
libtpu: 0.0.40
codegen_flags: <defaults>
</compile_context>

<pallas_src>
import jax
import jax.numpy as jnp
from jax.experimental import pallas as pl
from jax.experimental.pallas import tpu as pltpu


def _round_up(x, m):
    return ((x + m - 1) // m) * m


# -----------------------------------------------------------------------------
# Kernel
# -----------------------------------------------------------------------------
def encoder_kernel(x_ref, w1_ref, b1_ref, w2_ref, b2_ref, o_ref):
    # fc1: (tb, in) @ (in, hid_p) on the MXU with f32 accumulation.
    # x is cast to the weight dtype (bf16 fast path) in-kernel: no separate
    # XLA convert pass over x, and the HBM read of x stays at its input dtype.
    x = x_ref[...].astype(w1_ref.dtype)
    h = jnp.dot(x, w1_ref[...], preferred_element_type=jnp.float32)
    # bias + tanh in f32 (VPU + EUP).
    h = jnp.tanh(h + b1_ref[...])
    # fc2: activations back to the weight dtype for the MXU; f32 accumulation.
    out = jnp.dot(h.astype(w2_ref.dtype), w2_ref[...],
                  preferred_element_type=jnp.float32)
    o_ref[...] = (out + b2_ref[...]).astype(o_ref.dtype)


# -----------------------------------------------------------------------------
# One-time parameter preparation (hoisted out of the hot path)
# -----------------------------------------------------------------------------
def prepare_encoder_params(w1, b1, w2, b2, *, use_bf16=True):
    """Pad hidden to a lane multiple and cast weights.  Call ONCE (at init),
    not per forward call.

    w1 : [in_dim, hidden]   (transpose of PyTorch's [out, in])
    b1 : [1, hidden]
    w2 : [hidden, out_dim]
    b2 : [1, out_dim]
    """
    in_dim, hidden = w1.shape
    hidden2, out_dim = w2.shape
    assert hidden2 == hidden and b1.shape == (1, hidden) and b2.shape == (1, out_dim)

    # hidden padded to a 128-lane multiple so fc1's N dim / fc2's K dim are
    # lane-dense.  Zero padding is exact: tanh(0 + 0) = 0 and padded W2 rows
    # are zero.  (128 also fills v5e's 128x128 MXU; at hidden>=200 this already
    # lands on a 256 multiple, which fills the v6e/v7x MXU.)
    hid_p = _round_up(hidden, 128)
    w_dtype = jnp.bfloat16 if use_bf16 else w1.dtype

    w1p = jnp.pad(w1, ((0, 0), (0, hid_p - hidden))).astype(w_dtype)
    b1p = jnp.pad(b1, ((0, 0), (0, hid_p - hidden))).astype(jnp.float32)
    w2p = jnp.pad(w2, ((0, hid_p - hidden), (0, 0))).astype(w_dtype)
    b2p = b2.astype(jnp.float32)

    return {
        "w1": w1p, "b1": b1p, "w2": w2p, "b2": b2p,
        "in_dim": in_dim, "hidden": hidden, "hid_p": hid_p,
        "out_dim": out_dim, "use_bf16": use_bf16,
    }


# -----------------------------------------------------------------------------
# Forward pass
# -----------------------------------------------------------------------------
def encoder_forward(x, params, latent_num, latent_dim, *, block_b=512):
    """Matches PyTorch Encoder.forward.  `params` comes from
    prepare_encoder_params (weights already padded / cast)."""
    B, in_dim = x.shape
    assert in_dim == params["in_dim"]
    out_dim = params["out_dim"]
    assert out_dim == latent_num * latent_dim
    hid_p = params["hid_p"]
    use_bf16 = params["use_bf16"]
    w1p, b1p, w2p, b2p = params["w1"], params["b1"], params["w2"], params["b2"]

    orig_dtype = x.dtype
    assert block_b % 16 == 0, "batch tile must be a multiple of 16"

    # --- batch tiling ---------------------------------------------------------
    # bf16 packs 2 rows per sublane -> use 16-row multiples; f32 uses 8.
    sub = 16 if use_bf16 else 8
    # Ensure >= 2 batch tiles whenever B allows it so both v7x TensorCores get
    # work (harmless on v5e/v6e's single TC).
    tb = min(block_b, max(sub, _round_up(pl.cdiv(B, 2), sub)))
    b_pad = _round_up(B, tb)
    xp = x if b_pad == B else jnp.pad(x, ((0, b_pad - B), (0, 0)))
    grid = (b_pad // tb,)

    # --- VMEM budget (resident weights x2 buffers + 2x pipelined tiles + temps)
    w_bytes = sum(int(a.size) * a.dtype.itemsize for a in (w1p, b1p, w2p, b2p))
    tile_bytes = 2 * (tb * in_dim * xp.dtype.itemsize
                      + tb * out_dim * jnp.dtype(orig_dtype).itemsize)
    temp_bytes = tb * hid_p * (4 + 2) + tb * out_dim * 4   # f32 h, bf16 h, f32 out
    vmem_needed = int(1.5 * (2 * w_bytes + tile_bytes + temp_bytes)) + (4 << 20)
    vmem_limit = min(max(vmem_needed, 32 << 20), 128 << 20)

    # --- cost estimate so XLA can schedule/overlap the custom call ------------
    flops = 2 * b_pad * (in_dim * hid_p + hid_p * out_dim)
    bytes_accessed = (int(xp.size) * xp.dtype.itemsize + w_bytes
                      + b_pad * out_dim * jnp.dtype(orig_dtype).itemsize)
    cost = pl.CostEstimate(flops=flops,
                           transcendentals=b_pad * hid_p,
                           bytes_accessed=bytes_accessed)

    out_flat = pl.pallas_call(
        encoder_kernel,
        out_shape=jax.ShapeDtypeStruct((b_pad, out_dim), orig_dtype),
        grid=grid,
        in_specs=[
            pl.BlockSpec((tb, in_dim), lambda i: (i, 0)),      # x: tiled over batch
            pl.BlockSpec((in_dim, hid_p), lambda i: (0, 0)),   # W1: VMEM-resident
            pl.BlockSpec((1, hid_p), lambda i: (0, 0)),        # b1: VMEM-resident
            pl.BlockSpec((hid_p, out_dim), lambda i: (0, 0)),  # W2: VMEM-resident
            pl.BlockSpec((1, out_dim), lambda i: (0, 0)),      # b2: VMEM-resident
        ],
        # Unpadded out_dim (block dim == full array dim): no over-wide writeback,
        # no post-kernel column-slice copy.
        out_specs=pl.BlockSpec((tb, out_dim), lambda i: (i, 0)),
        compiler_params=pltpu.CompilerParams(
            dimension_semantics=("parallel",),   # shard batch tiles across TCs (v7x)
            vmem_limit_bytes=vmem_limit,
        ),
        cost_estimate=cost,
    )(xp, w1p, b1p, w2p, b2p)

    if b_pad != B:
        out_flat = out_flat[:B]
    # reshape to (B, latent_num, latent_dim) is metadata only.
    return out_flat.reshape(B, latent_num, latent_dim)


# -----------------------------------------------------------------------------
# Init mimicking nn.Linear's U(-1/sqrt(fan_in), 1/sqrt(fan_in))
# -----------------------------------------------------------------------------
def init_params(key, in_dim, hidden, latent_num, latent_dim, dtype=jnp.float32):
    out_dim = latent_num * latent_dim
    k1, k2, k3, k4 = jax.random.split(key, 4)
    bnd1 = 1.0 / (in_dim ** 0.5)
    bnd2 = 1.0 / (hidden ** 0.5)
    # Stored as [in, out] (transpose of PyTorch's [out, in]) for row-major matmul.
    w1 = jax.random.uniform(k1, (in_dim, hidden), dtype, -bnd1, bnd1)
    b1 = jax.random.uniform(k2, (1, hidden), dtype, -bnd1, bnd1)
    w2 = jax.random.uniform(k3, (hidden, out_dim), dtype, -bnd2, bnd2)
    b2 = jax.random.uniform(k4, (1, out_dim), dtype, -bnd2, bnd2)
    return w1, b1, w2, b2


if __name__ == "__main__":
    # Small shapes consistent with the module's forward.
    B = 40            # not a tile multiple -> exercises batch padding / row slice
    IN_DIM = 128
    HIDDEN = 64       # padded once to 128 lanes in prepare_encoder_params
    LATENT_NUM = 6
    LATENT_DIM = 8    # out_dim = 48, intentionally NOT padded (full-dim block)

    key = jax.random.PRNGKey(0)
    kx, kp = jax.random.split(key)
    x = jax.random.normal(kx, (B, IN_DIM), jnp.float32)
    w1, b1, w2, b2 = init_params(kp, IN_DIM, HIDDEN, LATENT_NUM, LATENT_DIM)

    # Pure-JAX f32 reference (same math as the PyTorch forward).
    ref = (jnp.tanh(x @ w1 + b1) @ w2 + b2).reshape(B, LATENT_NUM, LATENT_DIM)

    # 1) Exact-semantics check: f32 path must match tightly.
    params_f32 = prepare_encoder_params(w1, b1, w2, b2, use_bf16=False)
    out_f32 = encoder_forward(x, params_f32, LATENT_NUM, LATENT_DIM, block_b=64)
    out_f32 = jax.block_until_ready(out_f32)
    assert out_f32.shape == (B, LATENT_NUM, LATENT_DIM)
    assert jnp.allclose(out_f32, ref, atol=1e-5, rtol=1e-5)

    # 2) Fast bf16 MXU path (f32 accumulation): looser tolerance.
    params_bf16 = prepare_encoder_params(w1, b1, w2, b2, use_bf16=True)
    out_bf16 = encoder_forward(x, params_bf16, LATENT_NUM, LATENT_DIM, block_b=64)
    out_bf16 = jax.block_until_ready(out_bf16)
    assert out_bf16.shape == (B, LATENT_NUM, LATENT_DIM)
    assert jnp.allclose(out_bf16, ref, atol=3e-2, rtol=3e-2)

    print("KERNEL_OK")
</pallas_src>

<mosaic_0001>
module attributes {stable_mosaic.version = 11 : i64} {
  func.func @encoder_kernel(%arg0: i32, %arg1: memref<24x128xf32, #tpu.memory_space<vmem>>, %arg2: memref<128x128xf32, #tpu.memory_space<vmem>>, %arg3: memref<1x128xf32, #tpu.memory_space<vmem>>, %arg4: memref<128x48xf32, #tpu.memory_space<vmem>>, %arg5: memref<1x48xf32, #tpu.memory_space<vmem>>, %arg6: memref<24x48xf32, #tpu.memory_space<vmem>>) attributes {dimension_semantics = [#tpu.dimension_semantics<parallel>], iteration_bounds = array<i64: 2>, scalar_prefetch = 0 : i64, scratch_operands = 0 : i64, tpu.core_type = #tpu.core_type<tc>, window_params = [{transform_indices = @transform_0, window_bounds = array<i64: 24, 128>}, {pipeline_mode = #tpu.pipeline_mode<synchronous>, transform_indices = @transform_1, window_bounds = array<i64: 128, 128>}, {pipeline_mode = #tpu.pipeline_mode<synchronous>, transform_indices = @transform_2, window_bounds = array<i64: 1, 128>}, {pipeline_mode = #tpu.pipeline_mode<synchronous>, transform_indices = @transform_3, window_bounds = array<i64: 128, 48>}, {pipeline_mode = #tpu.pipeline_mode<synchronous>, transform_indices = @transform_4, window_bounds = array<i64: 1, 48>}, {transform_indices = @transform_5, window_bounds = array<i64: 24, 48>}]} {
    %c0 = arith.constant 0 : index
    %c0_0 = arith.constant 0 : index
    %0 = vector.load %arg1[%c0, %c0_0] : memref<24x128xf32, #tpu.memory_space<vmem>>, vector<24x128xf32>
    %c0_1 = arith.constant 0 : index
    %c0_2 = arith.constant 0 : index
    %1 = vector.load %arg2[%c0_1, %c0_2] : memref<128x128xf32, #tpu.memory_space<vmem>>, vector<128x128xf32>
    %cst = arith.constant dense<0.000000e+00> : vector<24x128xf32>
    %2 = tpu.matmul %0, %1, %cst {dimension_numbers = #tpu.dot_dimension_numbers<[1], [0], [0], [1], [0, 0, 1, 1], [], []>} : vector<24x128xf32>, vector<128x128xf32>, vector<24x128xf32> -> vector<24x128xf32>
    %c0_3 = arith.constant 0 : index
    %c0_4 = arith.constant 0 : index
    %3 = vector.load %arg3[%c0_3, %c0_4] : memref<1x128xf32, #tpu.memory_space<vmem>>, vector<1x128xf32>
    %4 = vector.broadcast %3 : vector<1x128xf32> to vector<24x128xf32>
    %5 = arith.addf %2, %4 : vector<24x128xf32>
    %6 = math.tanh %5 : vector<24x128xf32>
    %c0_5 = arith.constant 0 : index
    %c0_6 = arith.constant 0 : index
    %7 = vector.load %arg4[%c0_5, %c0_6] : memref<128x48xf32, #tpu.memory_space<vmem>>, vector<128x48xf32>
    %cst_7 = arith.constant dense<0.000000e+00> : vector<24x48xf32>
    %8 = tpu.matmul %6, %7, %cst_7 {dimension_numbers = #tpu.dot_dimension_numbers<[1], [0], [0], [1], [0, 0, 1, 1], [], []>} : vector<24x128xf32>, vector<128x48xf32>, vector<24x48xf32> -> vector<24x48xf32>
    %c0_8 = arith.constant 0 : index
    %c0_9 = arith.constant 0 : index
    %9 = vector.load %arg5[%c0_8, %c0_9] : memref<1x48xf32, #tpu.memory_space<vmem>>, vector<1x48xf32>
    %10 = vector.broadcast %9 : vector<1x48xf32> to vector<24x48xf32>
    %11 = arith.addf %8, %10 : vector<24x48xf32>
    %c0_10 = arith.constant 0 : index
    %c0_11 = arith.constant 0 : index
    %12 = vector.load %arg6[%c0_10, %c0_11] : memref<24x48xf32, #tpu.memory_space<vmem>>, vector<24x48xf32>
    tpu.vector_store %arg6[%c0_10, %c0_11], %11 {strides = array<i32>} : memref<24x48xf32, #tpu.memory_space<vmem>>, vector<24x48xf32>,
    return
  }
  func.func @transform_0(%arg0: i32) -> (i32, i32) {
    %c0_i32 = arith.constant 0 : i32
    %c0_i32_0 = arith.constant 0 : i32
    return %arg0, %c0_i32 : i32, i32
  }
  func.func @transform_1(%arg0: i32) -> (i32, i32) {
    %c0_i32 = arith.constant 0 : i32
    %c0_i32_0 = arith.constant 0 : i32
    %c0_i32_1 = arith.constant 0 : i32
    return %c0_i32, %c0_i32_0 : i32, i32
  }
  func.func @transform_2(%arg0: i32) -> (i32, i32) {
    %c0_i32 = arith.constant 0 : i32
    %c0_i32_0 = arith.constant 0 : i32
    %c0_i32_1 = arith.constant 0 : i32
    return %c0_i32, %c0_i32_0 : i32, i32
  }
  func.func @transform_3(%arg0: i32) -> (i32, i32) {
    %c0_i32 = arith.constant 0 : i32
    %c0_i32_0 = arith.constant 0 : i32
    %c0_i32_1 = arith.constant 0 : i32
    return %c0_i32, %c0_i32_0 : i32, i32
  }
  func.func @transform_4(%arg0: i32) -> (i32, i32) {
    %c0_i32 = arith.constant 0 : i32
    %c0_i32_0 = arith.constant 0 : i32
    %c0_i32_1 = arith.constant 0 : i32
    return %c0_i32, %c0_i32_0 : i32, i32
  }
  func.func @transform_5(%arg0: i32) -> (i32, i32) {
    %c0_i32 = arith.constant 0 : i32
    %c0_i32_0 = arith.constant 0 : i32
    return %arg0, %c0_i32 : i32, i32
  }
}

</mosaic_0001>

<llo_original>
// kernel: tpu_custom_call.1
$region0: #{tpu_custom_call.1}
  #allocation0 [shape = 'u32[]', space=smem, size = 0x4, offset = 0x4, fixed_abs, tag = 'smem constant byte address 0x4 - core index']
  #allocation1 [shape = 'u32[144,128]{1,0:T(1,128)}', space=vmem, size = 0x12000, scoped, tag = 'internal scratch']
  %s0 = inlined_call_operand.vmem [shape: f32[48,128], index: 0, kind: input, shape index: {}]
  %s1 = inlined_call_operand.vmem [shape: f32[128,128], index: 1, kind: input, shape index: {}]
  %s2 = inlined_call_operand.vmem [shape: f32[1,128], index: 2, kind: input, shape index: {}]
  %s3 = inlined_call_operand.vmem [shape: f32[128,48], index: 3, kind: input, shape index: {}]
  %s4 = inlined_call_operand.vmem [shape: f32[1,48], index: 4, kind: input, shape index: {}]
  %s5 = inlined_call_operand.hbm [shape: f32[48,48], index: 5, kind: output, shape index: {}]
  %s6 = sld [smem:[#allocation0]]
  $region53: #{tpu_custom_call.1} parent=0
    _
  %s8 = ssub.s32 1, %s6
  %s9 = scalar_select 0, %s8, %s6
  $region1: #{tpu_custom_call.1} parent=0
    #allocation2 [shape = 'u8[24576]{0}', space=vmem, size = 0x6000, scoped, tag = 'output window, operand 0']
    #allocation3 [shape = 's32[2]{0}', space=sflag, size = 0x8, scoped, tag = 'scoped memory for tpu_custom_call.1']
    %10 = vsyncpa [#allocation3], 0
    %s11 = scalar_lea.sflag [#allocation3], 1
    %12 = vsyncpa %s11, 0
    loop: start=0, step=1, limit=4
    $region2: #{tpu_custom_call.1} parent=1 // loop_pre_header
      _
    $region3: #{tpu_custom_call.1} parent=1 // loop_header
      %s14 = sphi 0, %s18
      %p15 = scmp.ge.s32.totalorder %s14, 4
      %s24 = sphi 0, %s26
      %s27 = sphi 0, %s24
      %s28 = sphi 0, %s27
      %s44 = sphi 0, %s28
      %s48 = sphi 0, %s48
      %s50 = sphi 0, %s48
      %s51 = sphi 0, %s50
      %s65 = sphi 0, %s51
      %s69 = sphi 0, %s69
      %s71 = sphi 0, %s69
      %s72 = sphi 0, %s71
      %s86 = sphi 0, %s72
      %s90 = sphi 0, %s90
      %s92 = sphi 0, %s90
      %s93 = sphi 0, %s92
      %s107 = sphi 0, %s93
      %s111 = sphi 0, %s111
      %s113 = sphi 0, %s111
      %s114 = sphi 0, %s113
      %s128 = sphi 0, %s114
      %s134 = sphi 0, %s136
      %s137 = sphi 0, %s134
      %s138 = sphi 0, %s137
      %s154 = sphi 0, %s138
    $region4: #{tpu_custom_call.1} parent=1 // loop_header_branch
      %17 = sbr.rel (%p15) target = $region8
    $region5: #{tpu_custom_call.1} parent=1 // loop_body
      %s19 = ssub.s32 %s14, 1
      %s20 = ssub.s32 %s14, 2
      %s21 = sadd.s32 %s14, 1
      %s22 = ssub.s32 %s14, %s21
      %p23 = scmp.eq.s32.totalorder %s22, 0
      %s25 = sadd.s32 %s24, 1
      %s26 = scalar_select %p23, %s24, %s25
      %p29 = pneg %p23
      %p30 = scmp.eq.s32.totalorder %s14, 1
      %p31 = por %p29, %p30
      %p32 = scmp.ne.s32.totalorder %s24, %s27
      %p33 = scmp.eq.s32.totalorder %s14, 0
      %p34 = por %p32, %p33
      %p35 = scmp.ne.s32.totalorder %s24, %s27
      %p36 = scmp.eq.s32.totalorder %s19, 1
      %p37 = por %p35, %p36
      %p38 = scmp.ne.s32.totalorder %s27, %s28
      %p39 = scmp.eq.s32.totalorder %s19, 0
      %p40 = por %p38, %p39
      %p41 = scmp.ne.s32.totalorder %s27, %s28
      %p42 = scmp.eq.s32.totalorder %s20, 1
      %p43 = por %p41, %p42
      %p45 = scmp.ne.s32.totalorder %s28, %s44
      %p46 = scmp.eq.s32.totalorder %s20, 0
      %p47 = por %p45, %p46
      %s49 = sadd.s32 %s48, 1
      %p52 = scmp.eq.s32.totalorder %s14, 1
      %p53 = scmp.ne.s32.totalorder %s48, %s50
      %p54 = scmp.eq.s32.totalorder %s14, 0
      %p55 = por %p53, %p54
      %p56 = scmp.ne.s32.totalorder %s48, %s50
      %p57 = scmp.eq.s32.totalorder %s19, 1
      %p58 = por %p56, %p57
      %p59 = scmp.ne.s32.totalorder %s50, %s51
      %p60 = scmp.eq.s32.totalorder %s19, 0
      %p61 = por %p59, %p60
      %p62 = scmp.ne.s32.totalorder %s50, %s51
      %p63 = scmp.eq.s32.totalorder %s20, 1
      %p64 = por %p62, %p63
      %p66 = scmp.ne.s32.totalorder %s51, %s65
      %p67 = scmp.eq.s32.totalorder %s20, 0
      %p68 = por %p66, %p67
      %s70 = sadd.s32 %s69, 1
      %p73 = scmp.eq.s32.totalorder %s14, 1
      %p74 = scmp.ne.s32.totalorder %s69, %s71
      %p75 = scmp.eq.s32.totalorder %s14, 0
      %p76 = por %p74, %p75
      %p77 = scmp.ne.s32.totalorder %s69, %s71
      %p78 = scmp.eq.s32.totalorder %s19, 1
      %p79 = por %p77, %p78
      %p80 = scmp.ne.s32.totalorder %s71, %s72
      %p81 = scmp.eq.s32.totalorder %s19, 0
      %p82 = por %p80, %p81
      %p83 = scmp.ne.s32.totalorder %s71, %s72
      %p84 = scmp.eq.s32.totalorder %s20, 1
      %p85 = por %p83, %p84
      %p87 = scmp.ne.s32.totalorder %s72, %s86
      %p88 = scmp.eq.s32.totalorder %s20, 0
      %p89 = por %p87, %p88
      %s91 = sadd.s32 %s90, 1
      %p94 = scmp.eq.s32.totalorder %s14, 1
      %p95 = scmp.ne.s32.totalorder %s90, %s92
      %p96 = scmp.eq.s32.totalorder %s14, 0
      %p97 = por %p95, %p96
      %p98 = scmp.ne.s32.totalorder %s90, %s92
      %p99 = scmp.eq.s32.totalorder %s19, 1
      %p100 = por %p98, %p99
      %p101 = scmp.ne.s32.totalorder %s92, %s93
      %p102 = scmp.eq.s32.totalorder %s19, 0
      %p103 = por %p101, %p102
      %p104 = scmp.ne.s32.totalorder %s92, %s93
      %p105 = scmp.eq.s32.totalorder %s20, 1
      %p106 = por %p104, %p105
      %p108 = scmp.ne.s32.totalorder %s93, %s107
      %p109 = scmp.eq.s32.totalorder %s20, 0
      %p110 = por %p108, %p109
      %s112 = sadd.s32 %s111, 1
      %p115 = scmp.eq.s32.totalorder %s14, 1
      %p116 = scmp.ne.s32.totalorder %s111, %s113
      %p117 = scmp.eq.s32.totalorder %s14, 0
      %p118 = por %p116, %p117
      %p119 = scmp.ne.s32.totalorder %s111, %s113
      %p120 = scmp.eq.s32.totalorder %s19, 1
      %p121 = por %p119, %p120
      %p122 = scmp.ne.s32.totalorder %s113, %s114
      %p123 = scmp.eq.s32.totalorder %s19, 0
      %p124 = por %p122, %p123
      %p125 = scmp.ne.s32.totalorder %s113, %s114
      %p126 = scmp.eq.s32.totalorder %s20, 1
      %p127 = por %p125, %p126
      %p129 = scmp.ne.s32.totalorder %s114, %s128
      %p130 = scmp.eq.s32.totalorder %s20, 0
      %p131 = por %p129, %p130
      %s132 = ssub.s32 %s14, %s21
      %p133 = scmp.eq.s32.totalorder %s132, 0
      %s135 = sadd.s32 %s134, 1
      %s136 = scalar_select %p133, %s134, %s135
      %p139 = pneg %p133
      %p140 = scmp.eq.s32.totalorder %s14, 1
      %p141 = por %p139, %p140
      %p142 = scmp.ne.s32.totalorder %s134, %s137
      %p143 = scmp.eq.s32.totalorder %s14, 0
      %p144 = por %p142, %p143
      %p145 = scmp.ne.s32.totalorder %s134, %s137
      %p146 = scmp.eq.s32.totalorder %s19, 1
      %p147 = por %p145, %p146
      %p148 = scmp.ne.s32.totalorder %s137, %s138
      %p149 = scmp.eq.s32.totalorder %s19, 0
      %p150 = por %p148, %p149
      %p151 = scmp.ne.s32.totalorder %s137, %s138
      %p152 = scmp.eq.s32.totalorder %s20, 1
      %p153 = por %p151, %p152
      %p155 = scmp.ne.s32.totalorder %s138, %s154
      %p156 = scmp.eq.s32.totalorder %s20, 0
      %p157 = por %p155, %p156
      %p158 = scmp.le.s32.totalorder 1, %s14
      %p159 = scmp.lt.s32.totalorder %s14, 3
      %p160 = pnand %p158, %p159
      %p161 = pneg %p160
      // Predicated region
      $region9: #{tpu_custom_call.1} parent=5 // pred_check
        _
      $region10: #{tpu_custom_call.1} parent=5 // pred_check_branch
        %163 = sbr.rel (%p160) target = $region12
      $region11: #{tpu_custom_call.1} parent=5 // pred_region
        %s164 = ssub.s32 %s14, 1
        // Predicated region
        $region13: #{tpu_custom_call.1} parent=11 // pred_check
          %p165 = pneg %p61
        $region14: #{tpu_custom_call.1} parent=11 // pred_check_branch
          %167 = sbr.rel (%p165) target = $region16
        $region15: #{tpu_custom_call.1} parent=11 // pred_region
          _
        $region16: #{tpu_custom_call.1} parent=11 // pred_fallthru
          _
        // Predicated region
        $region17: #{tpu_custom_call.1} parent=11 // pred_check
          %p168 = pneg %p82
        $region18: #{tpu_custom_call.1} parent=11 // pred_check_branch
          %170 = sbr.rel (%p168) target = $region20
        $region19: #{tpu_custom_call.1} parent=11 // pred_region
          _
        $region20: #{tpu_custom_call.1} parent=11 // pred_fallthru
          _
        // Predicated region
        $region21: #{tpu_custom_call.1} parent=11 // pred_check
          %p171 = pneg %p103
        $region22: #{tpu_custom_call.1} parent=11 // pred_check_branch
          %173 = sbr.rel (%p171) target = $region24
        $region23: #{tpu_custom_call.1} parent=11 // pred_region
          _
        $region24: #{tpu_custom_call.1} parent=11 // pred_fallthru
          _
        // Predicated region
        $region25: #{tpu_custom_call.1} parent=11 // pred_check
          %p174 = pneg %p124
        $region26: #{tpu_custom_call.1} parent=11 // pred_check_branch
          %176 = sbr.rel (%p174) target = $region28
        $region27: #{tpu_custom_call.1} parent=11 // pred_region
          _
        $region28: #{tpu_custom_call.1} parent=11 // pred_fallthru
          _
      $region12: #{tpu_custom_call.1} parent=5 // pred_fallthru
        _
      %p177 = scmp.lt.s32.totalorder %s14, 2
      // Predicated region
      $region29: #{tpu_custom_call.1} parent=5 // pred_check
        %p178 = pneg %p177
      $region30: #{tpu_custom_call.1} parent=5 // pred_check_branch
        %180 = sbr.rel (%p178) target = $region32
      $region31: #{tpu_custom_call.1} parent=5 // pred_region
        // Predicated region
        $region33: #{tpu_custom_call.1} parent=31 // pred_check
          %p181 = pneg %p34
        $region34: #{tpu_custom_call.1} parent=31 // pred_check_branch
          %183 = sbr.rel (%p181) target = $region36
        $region35: #{tpu_custom_call.1} parent=31 // pred_region
          %s184 = smul.u32 3, %s14
          %p185 = scmp.lt.s32.totalorder %s184, 5
          %s186 = scalar_select %p185, %s184, 5
          %s187 = smul.addr %s186, 8
          %s188 = scalar_lea.vmem %s0, %s187
          %s189 = smul.u32 3, %s14
        $region36: #{tpu_custom_call.1} parent=31 // pred_fallthru
          _
      $region32: #{tpu_custom_call.1} parent=5 // pred_fallthru
        _
      %p190 = scmp.le.s32.totalorder 1, %s14
      %p191 = scmp.lt.s32.totalorder %s14, 3
      %p192 = pnand %p190, %p191
      %p193 = pneg %p192
      // Predicated region
      $region37: #{tpu_custom_call.1} parent=5 // pred_check
        _
      $region38: #{tpu_custom_call.1} parent=5 // pred_check_branch
        %195 = sbr.rel (%p192) target = $region40
      $region39: #{tpu_custom_call.1} parent=5 // pred_region
        %s196 = ssub.s32 %s14, 1
        %s197 = smul.u32 3, %s19
        %p198 = scmp.lt.s32.totalorder %s197, 5
        %s199 = scalar_select %p198, %s197, 5
        %s200 = smul.addr %s199, 8
        %s201 = scalar_lea.vmem %s0, %s200
        %p202 = pneg %p40
        %p203 = pneg %p37
        %p204 = pneg %p61
        %p205 = pneg %p58
        %p206 = pneg %p82
        %p207 = pneg %p79
        %p208 = pneg %p103
        %p209 = pneg %p100
        %p210 = pneg %p124
        %p211 = pneg %p121
        %p212 = pneg %p150
        %p213 = pneg %p147
        %s214 = sand.u32 %s137, 1
        %s215 = scalar_lea.sflag [#allocation3], %s214
        %s216 = sand.u32 %s137, 1
        %s217 = smul.addr %s216, 24
        %s218 = scalar_lea.vmem [#allocation2], %s217
        %s219 = smul.u32 3, %s19
        %p220 = scmp.lt.s32.totalorder %s219, 5
        %s221 = scalar_select %p220, %s219, 5
        %s222 = smul.addr %s221, 8
        %s223 = scalar_lea.vmem %s0, %s222
        %s224 = smul.u32 3, %s19
        %s225 = smul.u32 3, %s19
        %v226 = vld [vmem:[%s223] sm:$0xff]
        %v227 = vld [vmem:[%s223 + $0x8] sm:$0xff]
        %v228 = vld [vmem:[%s223 + $0x10] sm:$0xff]
        %v229 = vld [vmem:[%s1] sm:$0xff]
        %v230 = vld [vmem:[%s1 + $0x8] sm:$0xff]
        %v231 = vld [vmem:[%s1 + $0x10] sm:$0xff]
        %v232 = vld [vmem:[%s1 + $0x18] sm:$0xff]
        %v233 = vld [vmem:[%s1 + $0x20] sm:$0xff]
        %v234 = vld [vmem:[%s1 + $0x28] sm:$0xff]
        %v235 = vld [vmem:[%s1 + $0x30] sm:$0xff]
        %v236 = vld [vmem:[%s1 + $0x38] sm:$0xff]
        %v237 = vld [vmem:[%s1 + $0x40] sm:$0xff]
        %v238 = vld [vmem:[%s1 + $0x48] sm:$0xff]
        %v239 = vld [vmem:[%s1 + $0x50] sm:$0xff]
        %v240 = vld [vmem:[%s1 + $0x58] sm:$0xff]
        %v241 = vld [vmem:[%s1 + $0x60] sm:$0xff]
        %v242 = vld [vmem:[%s1 + $0x68] sm:$0xff]
        %v243 = vld [vmem:[%s1 + $0x70] sm:$0xff]
        %v244 = vld [vmem:[%s1 + $0x78] sm:$0xff]
        %v245 = vld [vmem:[%s2] sm:$0x1]
        %v247 = vlaneseq
        %v248 = vshrl.u32 %v247, 7
        %v249 = vsub.s32 0, %v248
        %v250 = vrot.slane %v245, %v249
        %252 = vmatprep.subr.mxu0 0.0
        %253 = vmatpush1.msra.mxu0 %v229
        %254 = vmatprep.subr.mxu0 0.0
        %255 = vmatpush1.msra.mxu0 %v230
        %256 = vmatprep.subr.mxu0 0.0
        %257 = vmatpush1.msra.mxu0 %v231
        %258 = vmatprep.subr.mxu0 0.0
        %259 = vmatpush1.msra.mxu0 %v232
        %260 = vmatprep.subr.mxu0 0.0
        %261 = vmatpush1.msra.mxu0 %v233
        %262 = vmatprep.subr.mxu0 0.0
        %263 = vmatpush1.msra.mxu0 %v234
        %264 = vmatprep.subr.mxu0 0.0
        %265 = vmatpush1.msra.mxu0 %v235
        %266 = vmatprep.subr.mxu0 0.0
        %267 = vmatpush1.msra.mxu0 %v236
        %268 = vmatprep.subr.mxu0 0.0
        %269 = vmatpush1.msra.mxu0 %v237
        %270 = vmatprep.subr.mxu0 0.0
        %271 = vmatpush1.msra.mxu0 %v238
        %272 = vmatprep.subr.mxu0 0.0
        %273 = vmatpush1.msra.mxu0 %v239
        %274 = vmatprep.subr.mxu0 0.0
        %275 = vmatpush1.msra.mxu0 %v240
        %276 = vmatprep.subr.mxu0 0.0
        %277 = vmatpush1.msra.mxu0 %v241
        %278 = vmatprep.subr.mxu0 0.0
        %279 = vmatpush1.msra.mxu0 %v242
        %280 = vmatprep.subr.mxu0 0.0
        %281 = vmatpush1.msra.mxu0 %v243
        %282 = vmatprep.subr.mxu0 0.0
        %283 = vmatpush1.msra.mxu0 %v244
        %284 = vmatprep.subr.mxu0 0.0
        %285 = vmatpush1.msra.mxu0 0.0
        %286 = vmatprep.subr.mxu0 0.0
        %287 = vmatpush1.msra.mxu0 0.0
        %288 = vmatprep.subr.mxu0 0.0
        %289 = vmatpush1.msra.mxu0 0.0
        %290 = vmatprep.subr.mxu0 0.0
        %291 = vmatpush1.msra.mxu0 0.0
        %292 = vmatprep.subr.mxu0 0.0
        %293 = vmatpush1.msra.mxu0 0.0
        %294 = vmatprep.subr.mxu0 0.0
        %295 = vmatpush1.msra.mxu0 0.0
        %296 = vmatprep.subr.mxu0 0.0
        %297 = vmatpush1.msra.mxu0 0.0
        %298 = vmatprep.subr.mxu0 0.0
        %299 = vmatpush1.msra.mxu0 0.0
        %300 = vmatprep.subr.mxu0 0.0
        %301 = vmatpush1.msra.mxu0 0.0
        %302 = vmatprep.subr.mxu0 0.0
        %303 = vmatpush1.msra.mxu0 0.0
        %304 = vmatprep.subr.mxu0 0.0
        %305 = vmatpush1.msra.mxu0 0.0
        %306 = vmatprep.subr.mxu0 0.0
        %307 = vmatpush1.msra.mxu0 0.0
        %308 = vmatprep.subr.mxu0 0.0
        %309 = vmatpush1.msra.mxu0 0.0
        %310 = vmatprep.subr.mxu0 0.0
        %311 = vmatpush1.msra.mxu0 0.0
        %312 = vmatprep.subr.mxu0 0.0
        %313 = vmatpush1.msra.mxu0 0.0
        %314 = vmatprep.subr.mxu0 0.0
        %315 = vmatpush1.msra.mxu0 0.0
        %316 = vmatprep.mubr.f32.mxu0 0.0
        %317 = vmatmul.mubr.f32.gmra.mrb[0].mxu0 %v226
        %v318 = vpop.f32.mrb[0].mxu0
        %v319 = vadd.f32 %v250, %v318
        %v320 = vpop.f32.mrb[0].mxu0
        %321 = vmatprep.mubr.f32.mxu0 0.0
        %322 = vmatmul.mubr.f32.gmra.mrb[0].mxu0 %v227
        %v323 = vpop.f32.mrb[0].mxu0
        %v324 = vadd.f32 %v250, %v323
        %v325 = vpop.f32.mrb[0].mxu0
        %326 = vmatprep.mubr.f32.mxu0 0.0
        %327 = vmatmul.mubr.f32.gmra.mrb[0].mxu0 %v228
        %v328 = vpop.f32.mrb[0].mxu0
        %v329 = vadd.f32 %v250, %v328
        %v330 = vpop.f32.mrb[0].mxu0
        %331 = vdwg.mxu0
        %v332 = vtanh.pop %v319
        %v333 = vtanh.pop %v324
        %v334 = vtanh.pop %v329
        %v335 = vld [vmem:[%s3] sm:$0xff]
        %v336 = vld [vmem:[%s3 + $0x8] sm:$0xff]
        %v337 = vld [vmem:[%s3 + $0x10] sm:$0xff]
        %v338 = vld [vmem:[%s3 + $0x18] sm:$0xff]
        %v339 = vld [vmem:[%s3 + $0x20] sm:$0xff]
        %v340 = vld [vmem:[%s3 + $0x28] sm:$0xff]
        %v341 = vld [vmem:[%s3 + $0x30] sm:$0xff]
        %v342 = vld [vmem:[%s3 + $0x38] sm:$0xff]
        %v343 = vld [vmem:[%s3 + $0x40] sm:$0xff]
        %v344 = vld [vmem:[%s3 + $0x48] sm:$0xff]
        %v345 = vld [vmem:[%s3 + $0x50] sm:$0xff]
        %v346 = vld [vmem:[%s3 + $0x58] sm:$0xff]
        %v347 = vld [vmem:[%s3 + $0x60] sm:$0xff]
        %v348 = vld [vmem:[%s3 + $0x68] sm:$0xff]
        %v349 = vld [vmem:[%s3 + $0x70] sm:$0xff]
        %v350 = vld [vmem:[%s3 + $0x78] sm:$0xff]
        %v351 = vld [vmem:[%s4] sm:$0x1]
        %v353 = vlaneseq
        %v354 = vshrl.u32 %v353, 7
        %v355 = vsub.s32 0, %v354
        %v356 = vrot.slane %v351, %v355
        %358 = vmatprep.subr.mxu0 0.0
        %359 = vmatpush1.msra.mxu0 %v335
        %360 = vmatprep.subr.mxu0 0.0
        %361 = vmatpush1.msra.mxu0 %v336
        %362 = vmatprep.subr.mxu0 0.0
        %363 = vmatpush1.msra.mxu0 %v337
        %364 = vmatprep.subr.mxu0 0.0
        %365 = vmatpush1.msra.mxu0 %v338
        %366 = vmatprep.subr.mxu0 0.0
        %367 = vmatpush1.msra.mxu0 %v339
        %368 = vmatprep.subr.mxu0 0.0
        %369 = vmatpush1.msra.mxu0 %v340
        %370 = vmatprep.subr.mxu0 0.0
        %371 = vmatpush1.msra.mxu0 %v341
        %372 = vmatprep.subr.mxu0 0.0
        %373 = vmatpush1.msra.mxu0 %v342
        %374 = vmatprep.subr.mxu0 0.0
        %375 = vmatpush1.msra.mxu0 %v343
        %376 = vmatprep.subr.mxu0 0.0
        %377 = vmatpush1.msra.mxu0 %v344
        %378 = vmatprep.subr.mxu0 0.0
        %379 = vmatpush1.msra.mxu0 %v345
        %380 = vmatprep.subr.mxu0 0.0
        %381 = vmatpush1.msra.mxu0 %v346
        %382 = vmatprep.subr.mxu0 0.0
        %383 = vmatpush1.msra.mxu0 %v347
        %384 = vmatprep.subr.mxu0 0.0
        %385 = vmatpush1.msra.mxu0 %v348
        %386 = vmatprep.subr.mxu0 0.0
        %387 = vmatpush1.msra.mxu0 %v349
        %388 = vmatprep.subr.mxu0 0.0
        %389 = vmatpush1.msra.mxu0 %v350
        %390 = vmatprep.subr.mxu0 0.0
        %391 = vmatpush1.msra.mxu0 0.0
        %392 = vmatprep.subr.mxu0 0.0
        %393 = vmatpush1.msra.mxu0 0.0
        %394 = vmatprep.subr.mxu0 0.0
        %395 = vmatpush1.msra.mxu0 0.0
        %396 = vmatprep.subr.mxu0 0.0
        %397 = vmatpush1.msra.mxu0 0.0
        %398 = vmatprep.subr.mxu0 0.0
        %399 = vmatpush1.msra.mxu0 0.0
        %400 = vmatprep.subr.mxu0 0.0
        %401 = vmatpush1.msra.mxu0 0.0
        %402 = vmatprep.subr.mxu0 0.0
        %403 = vmatpush1.msra.mxu0 0.0
        %404 = vmatprep.subr.mxu0 0.0
        %405 = vmatpush1.msra.mxu0 0.0
        %406 = vmatprep.subr.mxu0 0.0
        %407 = vmatpush1.msra.mxu0 0.0
        %408 = vmatprep.subr.mxu0 0.0
        %409 = vmatpush1.msra.mxu0 0.0
        %410 = vmatprep.subr.mxu0 0.0
        %411 = vmatpush1.msra.mxu0 0.0
        %412 = vmatprep.subr.mxu0 0.0
        %413 = vmatpush1.msra.mxu0 0.0
        %414 = vmatprep.subr.mxu0 0.0
        %415 = vmatpush1.msra.mxu0 0.0
        %416 = vmatprep.subr.mxu0 0.0
        %417 = vmatpush1.msra.mxu0 0.0
        %418 = vmatprep.subr.mxu0 0.0
        %419 = vmatpush1.msra.mxu0 0.0
        %420 = vmatprep.subr.mxu0 0.0
        %421 = vmatpush1.msra.mxu0 0.0
        %422 = vmatprep.mubr.f32.mxu0 0.0
        %423 = vmatmul.mubr.f32.gmra.mrb[0].mxu0 %v332
        %v424 = vpop.f32.mrb[0].mxu0
        %v425 = vadd.f32 %v356, %v424
        %v426 = vpop.f32.mrb[0].mxu0
        %427 = vmatprep.mubr.f32.mxu0 0.0
        %428 = vmatmul.mubr.f32.gmra.mrb[0].mxu0 %v333
        %v429 = vpop.f32.mrb[0].mxu0
        %v430 = vadd.f32 %v356, %v429
        %v431 = vpop.f32.mrb[0].mxu0
        %432 = vmatprep.mubr.f32.mxu0 0.0
        %433 = vmatmul.mubr.f32.gmra.mrb[0].mxu0 %v334
        %v434 = vpop.f32.mrb[0].mxu0
        %v435 = vadd.f32 %v356, %v434
        %v436 = vpop.f32.mrb[0].mxu0
        %437 = vdwg.mxu0
        %vm438 = vcmask 392192
        %439 = vst.msk [vmem:[%s218] sm:$0xff] %vm438, %v425
        %440 = vst.msk [vmem:[%s218 + $0x8] sm:$0xff] %vm438, %v430
        %441 = vst.msk [vmem:[%s218 + $0x10] sm:$0xff] %vm438, %v435
        %s442 = sand.u32 %s137, 1
        %s443 = scalar_lea.sflag [#allocation3], %s442
        %s444 = sand.u32 %s137, 1
        %s445 = smul.addr %s444, 24
        %s446 = scalar_lea.vmem [#allocation2], %s445
        // Predicated region
        $region41: #{tpu_custom_call.1} parent=39 // pred_check
          %p447 = pneg %p147
        $region42: #{tpu_custom_call.1} parent=39 // pred_check_branch
          %449 = sbr.rel (%p447) target = $region44
        $region43: #{tpu_custom_call.1} parent=39 // pred_region
          %s450 = smul.u32 3, %s19
          %s452 = ssub.s32 384, 384
          %453 = vsyncadd %s443, %s452
          %s454 = smul.addr %s450, 128
          %s455 = scalar_lea.hbm %s5, %s454
          %s456 = sshll.u32 %s446, 4
          %s457 = int_to_ptr.vmem [resolvable:$true] %s456
          %462 = dma.vmem_to_hbm [thread:$0]  %s457, 384, %s455, %s443, 128, 128, 8
        $region44: #{tpu_custom_call.1} parent=39 // pred_fallthru
          _
      $region40: #{tpu_custom_call.1} parent=5 // pred_fallthru
        _
      %p463 = scmp.le.s32.totalorder 2, %s14
      // Predicated region
      $region45: #{tpu_custom_call.1} parent=5 // pred_check
        %p464 = pneg %p463
      $region46: #{tpu_custom_call.1} parent=5 // pred_check_branch
        %466 = sbr.rel (%p464) target = $region48
      $region47: #{tpu_custom_call.1} parent=5 // pred_region
        %s467 = ssub.s32 %s14, 2
        // Predicated region
        $region49: #{tpu_custom_call.1} parent=47 // pred_check
          %p468 = pneg %p153
        $region50: #{tpu_custom_call.1} parent=47 // pred_check_branch
          %470 = sbr.rel (%p468) target = $region52
        $region51: #{tpu_custom_call.1} parent=47 // pred_region
          %s471 = sand.u32 %s138, 1
          %s472 = scalar_lea.sflag [#allocation3], %s471
          %s473 = sand.u32 %s138, 1
          %s474 = smul.addr %s473, 24
          %s475 = scalar_lea.vmem [#allocation2], %s474
          %476 = dma.done %s472, 384
        $region52: #{tpu_custom_call.1} parent=47 // pred_fallthru
          _
      $region48: #{tpu_custom_call.1} parent=5 // pred_fallthru
        _
    $region6: #{tpu_custom_call.1} parent=1 // loop_footer
      %s18 = sadd.s32 1, %s14
    $region7: #{tpu_custom_call.1} parent=1 // loop_footer_branch
      %13 = sbr.rel target = $region3
    $region8: #{tpu_custom_call.1} parent=1 // loop_exit
      _
    %477 = vsyncpa [#allocation3], 1
    %s478 = scalar_lea.sflag [#allocation3], 1
    %479 = vsyncpa %s478, 1

</llo_original>
